<compile_context>
chip_gen: v5e
topology: v5e:2x2
jax: 0.10.0
libtpu: 0.0.40
codegen_flags: <defaults>
</compile_context>

<pallas_src>
import jax
import jax.numpy as jnp
from jax.experimental import pallas as pl
from jax.experimental.pallas import tpu as pltpu


def _round_up(n, m):
    return ((n + m - 1) // m) * m


def _fused_attention_kernel(x_ref, invn_ref, w_ref, out_ref, seg_ref, tg_ref):
    """grid = (phase, node_tile).  phase 0: masked sum; phase 1: weighted sum."""
    phase = pl.program_id(0)
    tile = pl.program_id(1)

    x = x_ref[...]                                   # [B, TN, D], native dtype
    b, tn, _ = x_ref.shape

    @pl.when((phase == 0) & (tile == 0))
    def _init():
        seg_ref[...] = jnp.zeros_like(seg_ref)
        out_ref[...] = jnp.zeros_like(out_ref)

    @pl.when(phase == 0)
    def _accumulate_sum():
        # Node-sum on the MXU: ones[B,1,TN] @ x[B,TN,D] -> [B,1,D].
        ones = jnp.ones((b, 1, tn), dtype=x.dtype)
        part = jnp.einsum('bqn,bnd->bqd', ones, x,
                          preferred_element_type=jnp.float32)
        seg_ref[...] += part[:, 0, :]

    @pl.when((phase == 1) & (tile == 0))
    def _compute_tg():
        # Tiny [B,D]x[D,D] matmul + tanh, runs exactly once at the phase boundary.
        mean = seg_ref[...] * invn_ref[...]
        tg_ref[...] = jnp.tanh(
            jnp.dot(mean, w_ref[...], preferred_element_type=jnp.float32))

    @pl.when(phase == 1)
    def _accumulate_out():
        tg = tg_ref[...].astype(x.dtype)                               # [B, D]
        # score[b, 0, n] = <x[b, n, :], tg[b, :]>  (MXU, rhs-transposed form)
        score = jnp.einsum('bqd,bnd->bqn', tg[:, None, :], x,
                           preferred_element_type=jnp.float32)         # [B,1,TN]
        koef = jax.nn.sigmoid(score).astype(x.dtype)                   # EUP
        # out += koef[B,1,TN] @ x[B,TN,D]  (MXU)
        part = jnp.einsum('bqn,bnd->bqd', koef, x,
                          preferred_element_type=jnp.float32)          # [B,1,D]
        out_ref[...] += part[:, 0, :]


def dense_attention_module(x, weight, mask=None, *, tile_n=None,
                           target_tile_bytes=2 << 20):
    """x: [B, N, D], weight: [D, D], mask: optional [B, N] (1 = real node).

    Assumes (standard dense-batch contract) that x is zero at padded / masked
    node slots; the mask is folded into x so no mask tensor is streamed.
    """
    B, N, D = x.shape
    out_dtype = x.dtype
    weight = weight.astype(jnp.float32)

    if mask is not None:
        mask_f = mask.reshape(B, N)
        x = x * mask_f.astype(x.dtype)[:, :, None]
        counts = jnp.sum(mask_f.astype(jnp.float32), axis=1, keepdims=True)
    else:
        counts = jnp.full((B, 1), float(N), dtype=jnp.float32)
    # Clamp: fully-masked graph -> mean 0 (PyTorch reference would give NaN/Inf).
    inv_n = (1.0 / jnp.maximum(counts, 1.0)).reshape(B, 1)

    # Node-tile size from a byte budget (~2 MiB per x tile), multiple of 8,
    # 128-aligned when large enough for the MXU TN contraction.
    itemsize = jnp.dtype(x.dtype).itemsize
    if tile_n is None:
        tn = max(8, int(target_tile_bytes) // (itemsize * B * D))
        tn = min(tn, 2048)
        tn = (tn // 128) * 128 if tn >= 128 else _round_up(tn, 8)
    else:
        tn = _round_up(int(tile_n), 8)
    tn = min(tn, _round_up(N, 8))
    n_pad = _round_up(N, tn)
    if n_pad != N:
        x = jnp.pad(x, ((0, 0), (0, n_pad - N), (0, 0)))
    n_tiles = n_pad // tn
    grid = (2, n_tiles)        # phase 0: node-sum, phase 1: weighted sum

    x_spec = pl.BlockSpec((B, tn, D), lambda p, i: (0, i, 0))
    invn_spec = pl.BlockSpec((B, 1), lambda p, i: (0, 0))
    w_spec = pl.BlockSpec((D, D), lambda p, i: (0, 0))
    out_spec = pl.BlockSpec((B, D), lambda p, i: (0, 0))   # resident accumulator

    # VMEM budget from the (lane-padded) tile plan: double-buffered x tiles +
    # tiny residents (W, out/seg/tg/inv_n).
    lane = _round_up(D, 128)
    tile_vmem = B * _round_up(tn, 8) * lane * itemsize
    resident_vmem = 4 * (_round_up(D, 8) * lane + 4 * _round_up(B, 8) * lane)
    vmem_limit = int(min(64 << 20, max(16 << 20,
                                       2 * tile_vmem + resident_vmem + (4 << 20))))

    cparams = pltpu.CompilerParams(
        # Both axes carry accumulator state -> sequential.
        # TODO(synk): v7x dual-TC split of the tile axis ("parallel") with
        # per-core partial accumulators summed in the wrapper.
        dimension_semantics=("arbitrary", "arbitrary"),
        vmem_limit_bytes=vmem_limit,
    )

    cost = pl.CostEstimate(
        flops=6 * B * n_pad * D + 2 * B * D * D,
        transcendentals=B * n_pad + B * D,
        bytes_accessed=2 * itemsize * B * n_pad * D + 4 * (2 * B * D + D * D + 2 * B),
    )

    out = pl.pallas_call(
        _fused_attention_kernel,
        out_shape=jax.ShapeDtypeStruct((B, D), jnp.float32),
        grid=grid,
        in_specs=[x_spec, invn_spec, w_spec],
        out_specs=out_spec,
        scratch_shapes=[pltpu.VMEM((B, D), jnp.float32),    # seg_sum (f32)
                        pltpu.VMEM((B, D), jnp.float32)],   # tg      (f32)
        compiler_params=cparams,
        cost_estimate=cost,
    )(x, inv_n, weight)

    return out.astype(out_dtype)


def reference_forward(x, weight, mask=None):
    """Pure-JAX reference matching the PyTorch DenseAttentionModule."""
    B, N, D = x.shape
    if mask is not None:
        num_nodes = mask.reshape(B, N).sum(axis=1, keepdims=True)
        mean = x.sum(axis=1) / num_nodes.astype(x.dtype)
    else:
        mean = x.mean(axis=1)
    tg = jnp.tanh(mean @ weight)                                         # [B, D]
    koefs = jax.nn.sigmoid(jnp.einsum('bnd,bd->bn', x, tg))              # [B, N]
    weighted = koefs[..., None] * x
    if mask is not None:
        weighted = weighted * mask.reshape(B, N, 1).astype(x.dtype)
    return weighted.sum(axis=1)                                          # [B, D]


if __name__ == "__main__":
    key = jax.random.PRNGKey(0)
    B, N, D = 2, 20, 32                      # batch, max nodes, filters_3
    k_x, k_w = jax.random.split(key, 2)
    x = jax.random.normal(k_x, (B, N, D), dtype=jnp.float32)
    weight = jax.random.normal(k_w, (D, D), dtype=jnp.float32) * 0.1

    # Dense-batch mask: graph 0 uses all 20 nodes, graph 1 only the first 14.
    mask = jnp.ones((B, N), dtype=jnp.float32).at[1, 14:].set(0.0)
    x = x * mask[:, :, None]                 # dense-batch contract: padded feats = 0

    # Multi-tile path (tile_n=8 -> N padded to 24, 3 node tiles): exercises the
    # two-phase accumulator / pl.when init logic and the zero-padded tail.
    out = jax.block_until_ready(dense_attention_module(x, weight, mask, tile_n=8))
    ref = reference_forward(x, weight, mask)
    assert out.shape == (B, D)
    assert jnp.allclose(out, ref, atol=1e-3, rtol=1e-3), "masked path mismatch"

    # Default (single-tile, single HBM read of x) path, mask=None.
    out_nm = jax.block_until_ready(dense_attention_module(x, weight, None))
    ref_nm = reference_forward(x, weight, None)
    assert jnp.allclose(out_nm, ref_nm, atol=1e-3, rtol=1e-3), "unmasked path mismatch"

    print("KERNEL_OK")
</pallas_src>

<mosaic_0001>
module attributes {stable_mosaic.version = 11 : i64} {
  func.func @_fused_attention_kernel(%arg0: i32, %arg1: i32, %arg2: memref<2x8x32xf32, #tpu.memory_space<vmem>>, %arg3: memref<2x1xf32, #tpu.memory_space<vmem>>, %arg4: memref<32x32xf32, #tpu.memory_space<vmem>>, %arg5: memref<2x32xf32, #tpu.memory_space<vmem>>, %arg6: memref<2x32xf32, #tpu.memory_space<vmem>>, %arg7: memref<2x32xf32, #tpu.memory_space<vmem>>) attributes {dimension_semantics = [#tpu.dimension_semantics<arbitrary>, #tpu.dimension_semantics<arbitrary>], iteration_bounds = array<i64: 2, 3>, scalar_prefetch = 0 : i64, scratch_operands = 2 : i64, tpu.core_type = #tpu.core_type<tc>, window_params = [{transform_indices = @transform_0, window_bounds = array<i64: 2, 8, 32>}, {pipeline_mode = #tpu.pipeline_mode<synchronous>, transform_indices = @transform_1, window_bounds = array<i64: 2, 1>}, {pipeline_mode = #tpu.pipeline_mode<synchronous>, transform_indices = @transform_2, window_bounds = array<i64: 32, 32>}, {pipeline_mode = #tpu.pipeline_mode<synchronous>, transform_indices = @transform_3, window_bounds = array<i64: 2, 32>}]} {
    %c0 = arith.constant 0 : index
    %c0_0 = arith.constant 0 : index
    %c0_1 = arith.constant 0 : index
    %0 = vector.load %arg2[%c0, %c0_0, %c0_1] : memref<2x8x32xf32, #tpu.memory_space<vmem>>, vector<2x8x32xf32>
    %c0_i32 = arith.constant 0 : i32
    %1 = arith.cmpi eq, %arg0, %c0_i32 : i32
    %c0_i32_2 = arith.constant 0 : i32
    %2 = arith.cmpi eq, %arg1, %c0_i32_2 : i32
    %3 = arith.andi %1, %2 : i1
    %4 = arith.extui %3 : i1 to i32
    %c0_i32_3 = arith.constant 0 : i32
    %5 = arith.cmpi ne, %4, %c0_i32_3 : i32
    scf.if %5 {
      %cst = arith.constant 0.000000e+00 : f32
      %17 = vector.broadcast %cst : f32 to vector<2x32xf32>
      %c0_10 = arith.constant 0 : index
      %c0_11 = arith.constant 0 : index
      %18 = vector.load %arg6[%c0_10, %c0_11] : memref<2x32xf32, #tpu.memory_space<vmem>>, vector<2x32xf32>
      tpu.vector_store %arg6[%c0_10, %c0_11], %17 {strides = array<i32>} : memref<2x32xf32, #tpu.memory_space<vmem>>, vector<2x32xf32>,
      %cst_12 = arith.constant 0.000000e+00 : f32
      %19 = vector.broadcast %cst_12 : f32 to vector<2x32xf32>
      %c0_13 = arith.constant 0 : index
      %c0_14 = arith.constant 0 : index
      %20 = vector.load %arg5[%c0_13, %c0_14] : memref<2x32xf32, #tpu.memory_space<vmem>>, vector<2x32xf32>
      tpu.vector_store %arg5[%c0_13, %c0_14], %19 {strides = array<i32>} : memref<2x32xf32, #tpu.memory_space<vmem>>, vector<2x32xf32>,
    } else {
    }
    %c0_i32_4 = arith.constant 0 : i32
    %6 = arith.cmpi eq, %arg0, %c0_i32_4 : i32
    %7 = arith.extui %6 : i1 to i32
    %c0_i32_5 = arith.constant 0 : i32
    %8 = arith.cmpi ne, %7, %c0_i32_5 : i32
    scf.if %8 {
      %cst = arith.constant 1.000000e+00 : f32
      %17 = vector.broadcast %cst : f32 to vector<2x1x8xf32>
      "tpu.trace_start"() <{level = 10 : i32, message = "bqn,bnd->bqd"}> : () -> ()
      %cst_10 = arith.constant dense<0.000000e+00> : vector<2x1x32xf32>
      %18 = tpu.matmul %17, %0, %cst_10 {dimension_numbers = #tpu.dot_dimension_numbers<[2], [1], [1], [2], [0, 0, 0, 1, 1, 2], [0], [0]>} : vector<2x1x8xf32>, vector<2x8x32xf32>, vector<2x1x32xf32> -> vector<2x1x32xf32>
      "tpu.trace_stop"() : () -> ()
      %c0_11 = arith.constant 0 : index
      %c0_12 = arith.constant 0 : index
      %19 = vector.load %arg6[%c0_11, %c0_12] : memref<2x32xf32, #tpu.memory_space<vmem>>, vector<2x32xf32>
      %20 = vector.shape_cast %18 : vector<2x1x32xf32> to vector<2x32xf32>
      %21 = arith.addf %19, %20 : vector<2x32xf32>
      %c0_13 = arith.constant 0 : index
      %c0_14 = arith.constant 0 : index
      %22 = vector.load %arg6[%c0_13, %c0_14] : memref<2x32xf32, #tpu.memory_space<vmem>>, vector<2x32xf32>
      tpu.vector_store %arg6[%c0_13, %c0_14], %21 {strides = array<i32>} : memref<2x32xf32, #tpu.memory_space<vmem>>, vector<2x32xf32>,
    } else {
    }
    %c1_i32 = arith.constant 1 : i32
    %9 = arith.cmpi eq, %arg0, %c1_i32 : i32
    %c0_i32_6 = arith.constant 0 : i32
    %10 = arith.cmpi eq, %arg1, %c0_i32_6 : i32
    %11 = arith.andi %9, %10 : i1
    %12 = arith.extui %11 : i1 to i32
    %c0_i32_7 = arith.constant 0 : i32
    %13 = arith.cmpi ne, %12, %c0_i32_7 : i32
    scf.if %13 {
      %c0_10 = arith.constant 0 : index
      %c0_11 = arith.constant 0 : index
      %17 = vector.load %arg6[%c0_10, %c0_11] : memref<2x32xf32, #tpu.memory_space<vmem>>, vector<2x32xf32>
      %c0_12 = arith.constant 0 : index
      %c0_13 = arith.constant 0 : index
      %18 = vector.load %arg3[%c0_12, %c0_13] : memref<2x1xf32, #tpu.memory_space<vmem>>, vector<2x1xf32>
      %19 = vector.broadcast %18 : vector<2x1xf32> to vector<2x32xf32>
      %20 = arith.mulf %17, %19 : vector<2x32xf32>
      %c0_14 = arith.constant 0 : index
      %c0_15 = arith.constant 0 : index
      %21 = vector.load %arg4[%c0_14, %c0_15] : memref<32x32xf32, #tpu.memory_space<vmem>>, vector<32x32xf32>
      %cst = arith.constant dense<0.000000e+00> : vector<2x32xf32>
      %22 = tpu.matmul %20, %21, %cst {dimension_numbers = #tpu.dot_dimension_numbers<[1], [0], [0], [1], [0, 0, 1, 1], [], []>} : vector<2x32xf32>, vector<32x32xf32>, vector<2x32xf32> -> vector<2x32xf32>
      %23 = math.tanh %22 : vector<2x32xf32>
      %c0_16 = arith.constant 0 : index
      %c0_17 = arith.constant 0 : index
      %24 = vector.load %arg7[%c0_16, %c0_17] : memref<2x32xf32, #tpu.memory_space<vmem>>, vector<2x32xf32>
      tpu.vector_store %arg7[%c0_16, %c0_17], %23 {strides = array<i32>} : memref<2x32xf32, #tpu.memory_space<vmem>>, vector<2x32xf32>,
    } else {
    }
    %c1_i32_8 = arith.constant 1 : i32
    %14 = arith.cmpi eq, %arg0, %c1_i32_8 : i32
    %15 = arith.extui %14 : i1 to i32
    %c0_i32_9 = arith.constant 0 : i32
    %16 = arith.cmpi ne, %15, %c0_i32_9 : i32
    scf.if %16 {
      %c0_10 = arith.constant 0 : index
      %c0_11 = arith.constant 0 : index
      %17 = vector.load %arg7[%c0_10, %c0_11] : memref<2x32xf32, #tpu.memory_space<vmem>>, vector<2x32xf32>
      %18 = vector.shape_cast %17 : vector<2x32xf32> to vector<2x1x32xf32>
      "tpu.trace_start"() <{level = 10 : i32, message = "bqd,bnd->bqn"}> : () -> ()
      %cst = arith.constant dense<0.000000e+00> : vector<2x1x8xf32>
      %19 = tpu.matmul %18, %0, %cst {dimension_numbers = #tpu.dot_dimension_numbers<[2], [2], [1], [1], [0, 0, 0, 1, 1, 1], [0], [0]>} : vector<2x1x32xf32>, vector<2x8x32xf32>, vector<2x1x8xf32> -> vector<2x1x8xf32>
      "tpu.trace_stop"() : () -> ()
      %20 = arith.negf %19 : vector<2x1x8xf32>
      %21 = math.exp %20 : vector<2x1x8xf32>
      %cst_12 = arith.constant 1.000000e+00 : f32
      %22 = vector.broadcast %cst_12 : f32 to vector<2x1x8xf32>
      %23 = arith.addf %22, %21 : vector<2x1x8xf32>
      %24 = arith.divf %22, %23 : vector<2x1x8xf32>
      "tpu.trace_start"() <{level = 10 : i32, message = "bqn,bnd->bqd"}> : () -> ()
      %cst_13 = arith.constant dense<0.000000e+00> : vector<2x1x32xf32>
      %25 = tpu.matmul %24, %0, %cst_13 {dimension_numbers = #tpu.dot_dimension_numbers<[2], [1], [1], [2], [0, 0, 0, 1, 1, 2], [0], [0]>} : vector<2x1x8xf32>, vector<2x8x32xf32>, vector<2x1x32xf32> -> vector<2x1x32xf32>
      "tpu.trace_stop"() : () -> ()
      %c0_14 = arith.constant 0 : index
      %c0_15 = arith.constant 0 : index
      %26 = vector.load %arg5[%c0_14, %c0_15] : memref<2x32xf32, #tpu.memory_space<vmem>>, vector<2x32xf32>
      %27 = vector.shape_cast %25 : vector<2x1x32xf32> to vector<2x32xf32>
      %28 = arith.addf %26, %27 : vector<2x32xf32>
      %c0_16 = arith.constant 0 : index
      %c0_17 = arith.constant 0 : index
      %29 = vector.load %arg5[%c0_16, %c0_17] : memref<2x32xf32, #tpu.memory_space<vmem>>, vector<2x32xf32>
      tpu.vector_store %arg5[%c0_16, %c0_17], %28 {strides = array<i32>} : memref<2x32xf32, #tpu.memory_space<vmem>>, vector<2x32xf32>,
    } else {
    }
    return
  }
  func.func @transform_0(%arg0: i32, %arg1: i32) -> (i32, i32, i32) {
    %c0_i32 = arith.constant 0 : i32
    %c0_i32_0 = arith.constant 0 : i32
    %c0_i32_1 = arith.constant 0 : i32
    return %c0_i32, %arg1, %c0_i32_0 : i32, i32, i32
  }
  func.func @transform_1(%arg0: i32, %arg1: i32) -> (i32, i32) {
    %c0_i32 = arith.constant 0 : i32
    %c0_i32_0 = arith.constant 0 : i32
    %c0_i32_1 = arith.constant 0 : i32
    return %c0_i32, %c0_i32_0 : i32, i32
  }
  func.func @transform_2(%arg0: i32, %arg1: i32) -> (i32, i32) {
    %c0_i32 = arith.constant 0 : i32
    %c0_i32_0 = arith.constant 0 : i32
    %c0_i32_1 = arith.constant 0 : i32
    return %c0_i32, %c0_i32_0 : i32, i32
  }
  func.func @transform_3(%arg0: i32, %arg1: i32) -> (i32, i32) {
    %c0_i32 = arith.constant 0 : i32
    %c0_i32_0 = arith.constant 0 : i32
    %c0_i32_1 = arith.constant 0 : i32
    return %c0_i32, %c0_i32_0 : i32, i32
  }
}

</mosaic_0001>

<llo_original>
// kernel: tpu_custom_call.1
$region0: #{tpu_custom_call.1}
  #allocation0 [shape = 'u32[]', space=smem, size = 0x4, offset = 0x4, fixed_abs, tag = 'smem constant byte address 0x4 - core index']
  #allocation1 [shape = 'u32[72,128]{1,0:T(1,128)}', space=vmem, size = 0x9000, scoped, tag = 'internal scratch']
  #allocation2 [shape = 'f32[2,32]{1,0:T(2,128)}', space=vmem, size = 0x400, scoped, tag = 'scratch operand']
  #allocation3 [shape = 'f32[2,32]{1,0:T(2,128)}', space=vmem, size = 0x400, scoped, tag = 'scratch operand']
  %s0 = inlined_call_operand.hbm [shape: f32[2,24,32], index: 0, kind: input, shape index: {}]
  %s1 = inlined_call_operand.vmem [shape: f32[2,1], index: 1, kind: input, shape index: {}]
  %s2 = inlined_call_operand.hbm [shape: f32[32,32], index: 2, kind: input, shape index: {}]
  %s3 = inlined_call_operand.hbm [shape: f32[2,32], index: 3, kind: output, shape index: {}]
  %s4 = sld [smem:[#allocation0]]
  $region69: #{tpu_custom_call.1} parent=0
    _
  %s6 = ssub.s32 1, %s4
  %s7 = scalar_select 0, %s6, %s4
  $region1: #{tpu_custom_call.1} parent=0
    #allocation4 [shape = 'u8[16384]{0}', space=vmem, size = 0x4000, scoped, tag = 'input window, operand 0']
    #allocation5 [shape = 's32[2]{0}', space=sflag, size = 0x8, scoped, tag = 'scoped memory for tpu_custom_call.1']
    #allocation6 [shape = 's32[2]{0}', space=sflag, size = 0x8, scoped, tag = 'scoped memory for tpu_custom_call.1']
    #allocation7 [shape = 'u8[16384]{0}', space=vmem, size = 0x4000, scoped, tag = 'input window, operand 2, single buffered']
    #allocation8 [shape = 's32[1]{0}', space=sflag, size = 0x4, scoped, tag = 'scoped memory for tpu_custom_call.1']
    #allocation9 [shape = 'u8[1024]{0}', space=vmem, size = 0x400, scoped, tag = 'output window, operand 0, single buffered']
    %8 = vsyncpa [#allocation5], 0
    %s9 = scalar_lea.sflag [#allocation5], 1
    %10 = vsyncpa %s9, 0
    %11 = vsyncpa [#allocation8], 0
    %12 = vsyncpa [#allocation6], 0
    loop: start=0, step=1, limit=8
    $region2: #{tpu_custom_call.1} parent=1 // loop_pre_header
      _
    $region3: #{tpu_custom_call.1} parent=1 // loop_header
      %s14 = sphi 0, %s18
      %p15 = scmp.ge.s32.totalorder %s14, 8
      %s21 = sphi 0, %s33
      %s22 = sphi 0, %s29
      %s23 = sphi 0, %s21
      %s24 = sphi 0, %s22
      %s25 = sphi 0, %s23
      %s26 = sphi 0, %s24
      %s36 = sphi 0, %s38
      %s39 = sphi 0, %s36
      %s40 = sphi 0, %s39
      %s56 = sphi 0, %s40
      %s60 = sphi 0, %s60
      %s62 = sphi 0, %s60
      %s63 = sphi 0, %s62
      %s77 = sphi 0, %s63
      %s81 = sphi 0, %s81
      %s83 = sphi 0, %s81
      %s84 = sphi 0, %s83
      %s98 = sphi 0, %s84
      %s102 = sphi 0, %s102
      %s104 = sphi 0, %s102
      %s105 = sphi 0, %s104
      %s119 = sphi 0, %s105
    $region4: #{tpu_custom_call.1} parent=1 // loop_header_branch
      %17 = sbr.rel (%p15) target = $region8
    $region5: #{tpu_custom_call.1} parent=1 // loop_body
      %s19 = ssub.s32 %s14, 1
      %s20 = ssub.s32 %s14, 2
      %s27 = sadd.s32 1, %s22
      %p28 = scmp.ge.s32.totalorder %s27, 3
      %s29 = scalar_select %p28, 0, %s27
      %s30 = sadd.s32 1, %s21
      %s31 = scalar_select %p28, %s30, %s21
      %p32 = scmp.ge.s32.totalorder %s31, 2
      %s33 = scalar_select %p32, 0, %s31
      %s34 = ssub.s32 %s22, %s29
      %p35 = scmp.eq.s32.totalorder %s34, 0
      %s37 = sadd.s32 %s36, 1
      %s38 = scalar_select %p35, %s36, %s37
      %p41 = pneg %p35
      %p42 = scmp.eq.s32.totalorder %s14, 5
      %p43 = por %p41, %p42
      %p44 = scmp.ne.s32.totalorder %s36, %s39
      %p45 = scmp.eq.s32.totalorder %s14, 0
      %p46 = por %p44, %p45
      %p47 = scmp.ne.s32.totalorder %s36, %s39
      %p48 = scmp.eq.s32.totalorder %s19, 5
      %p49 = por %p47, %p48
      %p50 = scmp.ne.s32.totalorder %s39, %s40
      %p51 = scmp.eq.s32.totalorder %s19, 0
      %p52 = por %p50, %p51
      %p53 = scmp.ne.s32.totalorder %s39, %s40
      %p54 = scmp.eq.s32.totalorder %s20, 5
      %p55 = por %p53, %p54
      %p57 = scmp.ne.s32.totalorder %s40, %s56
      %p58 = scmp.eq.s32.totalorder %s20, 0
      %p59 = por %p57, %p58
      %s61 = sadd.s32 %s60, 1
      %p64 = scmp.eq.s32.totalorder %s14, 5
      %p65 = scmp.ne.s32.totalorder %s60, %s62
      %p66 = scmp.eq.s32.totalorder %s14, 0
      %p67 = por %p65, %p66
      %p68 = scmp.ne.s32.totalorder %s60, %s62
      %p69 = scmp.eq.s32.totalorder %s19, 5
      %p70 = por %p68, %p69
      %p71 = scmp.ne.s32.totalorder %s62, %s63
      %p72 = scmp.eq.s32.totalorder %s19, 0
      %p73 = por %p71, %p72
      %p74 = scmp.ne.s32.totalorder %s62, %s63
      %p75 = scmp.eq.s32.totalorder %s20, 5
      %p76 = por %p74, %p75
      %p78 = scmp.ne.s32.totalorder %s63, %s77
      %p79 = scmp.eq.s32.totalorder %s20, 0
      %p80 = por %p78, %p79
      %s82 = sadd.s32 %s81, 1
      %p85 = scmp.eq.s32.totalorder %s14, 5
      %p86 = scmp.ne.s32.totalorder %s81, %s83
      %p87 = scmp.eq.s32.totalorder %s14, 0
      %p88 = por %p86, %p87
      %p89 = scmp.ne.s32.totalorder %s81, %s83
      %p90 = scmp.eq.s32.totalorder %s19, 5
      %p91 = por %p89, %p90
      %p92 = scmp.ne.s32.totalorder %s83, %s84
      %p93 = scmp.eq.s32.totalorder %s19, 0
      %p94 = por %p92, %p93
      %p95 = scmp.ne.s32.totalorder %s83, %s84
      %p96 = scmp.eq.s32.totalorder %s20, 5
      %p97 = por %p95, %p96
      %p99 = scmp.ne.s32.totalorder %s84, %s98
      %p100 = scmp.eq.s32.totalorder %s20, 0
      %p101 = por %p99, %p100
      %s103 = sadd.s32 %s102, 1
      %p106 = scmp.eq.s32.totalorder %s14, 5
      %p107 = scmp.ne.s32.totalorder %s102, %s104
      %p108 = scmp.eq.s32.totalorder %s14, 0
      %p109 = por %p107, %p108
      %p110 = scmp.ne.s32.totalorder %s102, %s104
      %p111 = scmp.eq.s32.totalorder %s19, 5
      %p112 = por %p110, %p111
      %p113 = scmp.ne.s32.totalorder %s104, %s105
      %p114 = scmp.eq.s32.totalorder %s19, 0
      %p115 = por %p113, %p114
      %p116 = scmp.ne.s32.totalorder %s104, %s105
      %p117 = scmp.eq.s32.totalorder %s20, 5
      %p118 = por %p116, %p117
      %p120 = scmp.ne.s32.totalorder %s105, %s119
      %p121 = scmp.eq.s32.totalorder %s20, 0
      %p122 = por %p120, %p121
      %p123 = scmp.le.s32.totalorder 1, %s14
      %p124 = scmp.lt.s32.totalorder %s14, 7
      %p125 = pnand %p123, %p124
      %p126 = pneg %p125
      // Predicated region
      $region9: #{tpu_custom_call.1} parent=5 // pred_check
        _
      $region10: #{tpu_custom_call.1} parent=5 // pred_check_branch
        %128 = sbr.rel (%p125) target = $region12
      $region11: #{tpu_custom_call.1} parent=5 // pred_region
        %s129 = ssub.s32 %s14, 1
        // Predicated region
        $region13: #{tpu_custom_call.1} parent=11 // pred_check
          %p130 = pneg %p73
        $region14: #{tpu_custom_call.1} parent=11 // pred_check_branch
          %132 = sbr.rel (%p130) target = $region16
        $region15: #{tpu_custom_call.1} parent=11 // pred_region
          _
        $region16: #{tpu_custom_call.1} parent=11 // pred_fallthru
          _
        // Predicated region
        $region17: #{tpu_custom_call.1} parent=11 // pred_check
          %p133 = pneg %p94
        $region18: #{tpu_custom_call.1} parent=11 // pred_check_branch
          %135 = sbr.rel (%p133) target = $region20
        $region19: #{tpu_custom_call.1} parent=11 // pred_region
          %137 = vsyncadd [#allocation8], 0
          %s138 = sshll.u32 %s2, 4
          %s139 = int_to_ptr.hbm [resolvable:$true] %s138
          %s140 = sshll.u32 [#allocation7], 4
          %s141 = int_to_ptr.vmem [resolvable:$true] %s140
          %146 = dma.hbm_to_vmem [thread:$0]  %s139, 512, %s141, [#allocation8], 128, 128, 8
        $region20: #{tpu_custom_call.1} parent=11 // pred_fallthru
          _
      $region12: #{tpu_custom_call.1} parent=5 // pred_fallthru
        _
      %p147 = scmp.lt.s32.totalorder %s14, 6
      // Predicated region
      $region21: #{tpu_custom_call.1} parent=5 // pred_check
        %p148 = pneg %p147
      $region22: #{tpu_custom_call.1} parent=5 // pred_check_branch
        %150 = sbr.rel (%p148) target = $region24
      $region23: #{tpu_custom_call.1} parent=5 // pred_region
        // Predicated region
        $region25: #{tpu_custom_call.1} parent=23 // pred_check
          %p151 = pneg %p46
        $region26: #{tpu_custom_call.1} parent=23 // pred_check_branch
          %153 = sbr.rel (%p151) target = $region28
        $region27: #{tpu_custom_call.1} parent=23 // pred_region
          %s154 = sand.u32 %s36, 1
          %s155 = scalar_lea.sflag [#allocation5], %s154
          %s156 = sand.u32 %s36, 1
          %s157 = smul.addr %s156, 16
          %s158 = scalar_lea.vmem [#allocation4], %s157
          %160 = vsyncadd %s155, 0
          %s161 = smul.addr %s22, 8
          %s162 = scalar_lea.hbm %s0, %s161
          %s163 = sshll.u32 %s162, 4
          %s164 = int_to_ptr.hbm [resolvable:$true] %s163
          %s165 = sshll.u32 %s158, 4
          %s166 = int_to_ptr.vmem [resolvable:$true] %s165
          %171 = dma.hbm_to_vmem [thread:$0]  %s164, 256, %s166, %s155, 384, 128, 8
        $region28: #{tpu_custom_call.1} parent=23 // pred_fallthru
          _
      $region24: #{tpu_custom_call.1} parent=5 // pred_fallthru
        _
      %p172 = scmp.le.s32.totalorder 1, %s14
      %p173 = scmp.lt.s32.totalorder %s14, 7
      %p174 = pnand %p172, %p173
      %p175 = pneg %p174
      // Predicated region
      $region29: #{tpu_custom_call.1} parent=5 // pred_check
        _
      $region30: #{tpu_custom_call.1} parent=5 // pred_check_branch
        %177 = sbr.rel (%p174) target = $region32
      $region31: #{tpu_custom_call.1} parent=5 // pred_region
        %s178 = ssub.s32 %s14, 1
        %s179 = sand.u32 %s39, 1
        %s180 = scalar_lea.sflag [#allocation5], %s179
        %s181 = sand.u32 %s39, 1
        %s182 = smul.addr %s181, 16
        %s183 = scalar_lea.vmem [#allocation4], %s182
        // Predicated region
        $region33: #{tpu_custom_call.1} parent=31 // pred_check
          %p184 = pneg %p52
        $region34: #{tpu_custom_call.1} parent=31 // pred_check_branch
          %186 = sbr.rel (%p184) target = $region36
        $region35: #{tpu_custom_call.1} parent=31 // pred_region
          %188 = dma.done %s180, 256
        $region36: #{tpu_custom_call.1} parent=31 // pred_fallthru
          _
        // Predicated region
        $region37: #{tpu_custom_call.1} parent=31 // pred_check
          %p189 = pneg %p94
        $region38: #{tpu_custom_call.1} parent=31 // pred_check_branch
          %191 = sbr.rel (%p189) target = $region40
        $region39: #{tpu_custom_call.1} parent=31 // pred_region
          %193 = dma.done [#allocation8], 512
        $region40: #{tpu_custom_call.1} parent=31 // pred_fallthru
          _
        %s194 = sand.u32 %s39, 1
        %s195 = scalar_lea.sflag [#allocation5], %s194
        %s196 = sand.u32 %s39, 1
        %s197 = smul.addr %s196, 16
        %s198 = scalar_lea.vmem [#allocation4], %s197
        %p199 = pneg %p52
        %p200 = pneg %p49
        %p201 = pneg %p73
        %p202 = pneg %p70
        %p203 = pneg %p94
        %p204 = pneg %p91
        %p205 = pneg %p115
        %p206 = pneg %p112
        %v207 = vld [vmem:[%s183] sm:$0xff]
        %v208 = vld [vmem:[%s183 + $0x8] sm:$0xff]
        %p209 = scmp.eq.s32.totalorder %s23, 0
        %p210 = scmp.eq.s32.totalorder %s24, 0
        %p211 = pnand %p209, %p210
        %p212 = pneg %p211
        // Predicated region
        $region41: #{tpu_custom_call.1} parent=31 // pred_check
          _
        $region42: #{tpu_custom_call.1} parent=31 // pred_check_branch
          %214 = sbr.rel (%p211) target = $region44
        $region43: #{tpu_custom_call.1} parent=31 // pred_region
          %vm215 = vcmask 254976
          %216 = vst.msk [vmem:[#allocation2] sm:$0x3] %vm215, 0.0
          %217 = vst.msk [vmem:[#allocation9] sm:$0x3] %vm215, 0.0
        $region44: #{tpu_custom_call.1} parent=31 // pred_fallthru
          _
        // Predicated region
        $region45: #{tpu_custom_call.1} parent=31 // pred_check
          %p218 = pneg %p209
        $region46: #{tpu_custom_call.1} parent=31 // pred_check_branch
          %220 = sbr.rel (%p218) target = $region48
        $region47: #{tpu_custom_call.1} parent=31 // pred_region
          %vm221 = vcmask 64512
          %v223 = vsel %vm221, 1.0, 0
          %225 = vmatpush.msra.mxu0 0.0
          %226 = vmatpush.msra.mxu0 0.0
          %227 = vmatpush.msra.mxu0 0.0
          %228 = vmatpush.msra.mxu0 0.0
          %229 = vmatpush.msra.mxu0 0.0
          %230 = vmatpush.msra.mxu0 0.0
          %231 = vmatpush.msra.mxu0 0.0
          %232 = vmatpush.msra.mxu0 0.0
          %233 = vmatpush.msra.mxu0 0.0
          %234 = vmatpush.msra.mxu0 0.0
          %235 = vmatpush.msra.mxu0 0.0
          %236 = vmatpush.msra.mxu0 0.0
          %237 = vmatpush.msra.mxu0 0.0
          %238 = vmatpush.msra.mxu0 0.0
          %239 = vmatpush.msra.mxu0 0.0
          %240 = vmatpush.msra.mxu0 %v207
          %241 = vmatmul.f32.gmra.mxu0 %v223
          %v242 = vpop.f32.mrf.mxu0
          %v243 = vadd.f32 0.0, %v242
          %244 = vdwg.mxu0
          %245 = vmatpush.msra.mxu0 0.0
          %246 = vmatpush.msra.mxu0 0.0
          %247 = vmatpush.msra.mxu0 0.0
          %248 = vmatpush.msra.mxu0 0.0
          %249 = vmatpush.msra.mxu0 0.0
          %250 = vmatpush.msra.mxu0 0.0
          %251 = vmatpush.msra.mxu0 0.0
          %252 = vmatpush.msra.mxu0 0.0
          %253 = vmatpush.msra.mxu0 0.0
          %254 = vmatpush.msra.mxu0 0.0
          %255 = vmatpush.msra.mxu0 0.0
          %256 = vmatpush.msra.mxu0 0.0
          %257 = vmatpush.msra.mxu0 0.0
          %258 = vmatpush.msra.mxu0 0.0
          %259 = vmatpush.msra.mxu0 0.0
          %260 = vmatpush.msra.mxu0 %v208
          %261 = vmatmul.f32.gmra.mxu0 %v223
          %v262 = vpop.f32.mrf.mxu0
          %v263 = vadd.f32 0.0, %v262
          %264 = vdwg.mxu0
          %v265 = vld [vmem:[#allocation2] sm:$0x3]
          %v268 = vrot.slane %v263, 7
          %vm269 = vcmask 1041409
          %v270 = vsel %vm269, %v268, %v243
          %v272 = vadd.f32 %v265, %v270
          %vm273 = vcmask 254976
          %274 = vst.msk [vmem:[#allocation2] sm:$0x3] %vm273, %v272
        $region48: #{tpu_custom_call.1} parent=31 // pred_fallthru
          _
        %p275 = scmp.eq.s32.totalorder %s23, 1
        %p276 = pnand %p275, %p210
        %p277 = pneg %p276
        // Predicated region
        $region49: #{tpu_custom_call.1} parent=31 // pred_check
          _
        $region50: #{tpu_custom_call.1} parent=31 // pred_check_branch
          %279 = sbr.rel (%p276) target = $region52
        $region51: #{tpu_custom_call.1} parent=31 // pred_region
          %v280 = vld [vmem:[#allocation2] sm:$0x3]
          %v281 = vld [vmem:[%s1] sm:$0x3]
          %283 = vset.pattern.permute.xlu0 0
          %284 = vperm.xlu0 %283, %v281
          %v285 = vpop.permute.xlu0 %284
          %v287 = vmul.f32 %v280, %v285
          %v288 = vld [vmem:[#allocation7] sm:$0xff]
          %v289 = vld [vmem:[#allocation7 + $0x8] sm:$0xff]
          %v290 = vld [vmem:[#allocation7 + $0x10] sm:$0xff]
          %v291 = vld [vmem:[#allocation7 + $0x18] sm:$0xff]
          %vm292 = vcmask 261120
          %v294 = vsel %vm292, %v287, 0
          %296 = vmatpush.msra.mxu0 0.0
          %297 = vmatpush.msra.mxu0 0.0
          %298 = vmatpush.msra.mxu0 0.0
          %299 = vmatpush.msra.mxu0 0.0
          %300 = vmatpush.msra.mxu0 0.0
          %301 = vmatpush.msra.mxu0 0.0
          %302 = vmatpush.msra.mxu0 0.0
          %303 = vmatpush.msra.mxu0 0.0
          %304 = vmatpush.msra.mxu0 0.0
          %305 = vmatpush.msra.mxu0 0.0
          %306 = vmatpush.msra.mxu0 0.0
          %307 = vmatpush.msra.mxu0 0.0
          %308 = vmatpush.msra.mxu0 %v291
          %309 = vmatpush.msra.mxu0 %v290
          %310 = vmatpush.msra.mxu0 %v289
          %311 = vmatpush.msra.mxu0 %v288
          %312 = vmatmul.f32.gmra.mxu0 %v294
          %v313 = vpop.f32.mrf.mxu0
          %v314 = vadd.f32 0.0, %v313
          %315 = vdwg.mxu0
          %v316 = vtanh.pop %v314
          %vm317 = vcmask 254976
          %318 = vst.msk [vmem:[#allocation3] sm:$0x3] %vm317, %v316
        $region52: #{tpu_custom_call.1} parent=31 // pred_fallthru
          _
        // Predicated region
        $region53: #{tpu_custom_call.1} parent=31 // pred_check
          %p319 = pneg %p275
        $region54: #{tpu_custom_call.1} parent=31 // pred_check_branch
          %321 = sbr.rel (%p319) target = $region56
        $region55: #{tpu_custom_call.1} parent=31 // pred_region
          %v322 = vld [vmem:[#allocation3] sm:$0x3]
          %v324 = vrot.slane %v322, 1
          %vm325 = vcmask 261120
          %v326 = vsel %vm325, %v322, 0
          %v329 = vsel %vm325, %v207, 0
          %331 = vmatpush.xpose.msra.mxu0 0.0
          %332 = vmatpush.xpose.msra.mxu0 0.0
          %333 = vmatpush.xpose.msra.mxu0 0.0
          %334 = vmatpush.xpose.msra.mxu0 0.0
          %335 = vmatpush.xpose.msra.mxu0 0.0
          %336 = vmatpush.xpose.msra.mxu0 0.0
          %337 = vmatpush.xpose.msra.mxu0 0.0
          %338 = vmatpush.xpose.msra.mxu0 0.0
          %339 = vmatpush.xpose.msra.mxu0 0.0
          %340 = vmatpush.xpose.msra.mxu0 0.0
          %341 = vmatpush.xpose.msra.mxu0 0.0
          %342 = vmatpush.xpose.msra.mxu0 0.0
          %343 = vmatpush.xpose.msra.mxu0 0.0
          %344 = vmatpush.xpose.msra.mxu0 0.0
          %345 = vmatpush.xpose.msra.mxu0 0.0
          %346 = vmatpush.xpose.msra.mxu0 %v329
          %347 = vmatmul.f32.gmra.mxu0 %v326
          %v348 = vpop.f32.mrf.mxu0
          %v349 = vadd.f32 0.0, %v348
          %350 = vdwg.mxu0
          %v351 = vsel %vm325, %v324, 0
          %v354 = vsel %vm325, %v208, 0
          %356 = vmatpush.xpose.msra.mxu0 0.0
          %357 = vmatpush.xpose.msra.mxu0 0.0
          %358 = vmatpush.xpose.msra.mxu0 0.0
          %359 = vmatpush.xpose.msra.mxu0 0.0
          %360 = vmatpush.xpose.msra.mxu0 0.0
          %361 = vmatpush.xpose.msra.mxu0 0.0
          %362 = vmatpush.xpose.msra.mxu0 0.0
          %363 = vmatpush.xpose.msra.mxu0 0.0
          %364 = vmatpush.xpose.msra.mxu0 0.0
          %365 = vmatpush.xpose.msra.mxu0 0.0
          %366 = vmatpush.xpose.msra.mxu0 0.0
          %367 = vmatpush.xpose.msra.mxu0 0.0
          %368 = vmatpush.xpose.msra.mxu0 0.0
          %369 = vmatpush.xpose.msra.mxu0 0.0
          %370 = vmatpush.xpose.msra.mxu0 0.0
          %371 = vmatpush.xpose.msra.mxu0 %v354
          %372 = vmatmul.f32.gmra.mxu0 %v351
          %v373 = vpop.f32.mrf.mxu0
          %v374 = vadd.f32 0.0, %v373
          %375 = vdwg.mxu0
          %v376 = vxor.u32 %v349, 2147483648
          %v377 = vxor.u32 %v374, 2147483648
          %v378 = vmul.f32 %v376, 1.442695
          %v379 = vpow.pop %v378
          %v380 = vmul.f32 %v377, 1.442695
          %v381 = vpow.pop %v380
          %v382 = vadd.f32 %v379, 1.0
          %v383 = vadd.f32 %v381, 1.0
          %v384 = vrcp.pop %v382
          %v385 = vmul.f32 %v382, %v384
          %v386 = vsub.f32 1.0, %v385
          %v387 = vmul.f32 %v384, %v386
          %v388 = vadd.f32 %v384, %v387
          %vm389 = vweird.f32 %v382
          %vm390 = vweird.f32 %v384
          %vm391 = vmor %vm389, %vm390
          %v392 = vsel %vm391, %v384, %v388
          %v393 = vand.u32 2147483647, %v382
          %vm394 = vcmp.eq.f32.partialorder %v393, 8.507059e+37
          %v395 = vand.u32 %v382, 2147483648
          %v396 = vor.u32 1.1754944e-38, %v395
          %v397 = vsel %vm394, %v396, %v392
          %v398 = vmul.f32 1.0, %v397
          %v399 = vrcp.pop %v383
          %v400 = vmul.f32 %v383, %v399
          %v401 = vsub.f32 1.0, %v400
          %v402 = vmul.f32 %v399, %v401
          %v403 = vadd.f32 %v399, %v402
          %vm404 = vweird.f32 %v383
          %vm405 = vweird.f32 %v399
          %vm406 = vmor %vm404, %vm405
          %v407 = vsel %vm406, %v399, %v403
          %v408 = vand.u32 2147483647, %v383
          %vm409 = vcmp.eq.f32.partialorder %v408, 8.507059e+37
          %v410 = vand.u32 %v383, 2147483648
          %v411 = vor.u32 1.1754944e-38, %v410
          %v412 = vsel %vm409, %v411, %v407
          %v413 = vmul.f32 1.0, %v412
          %vm414 = vcmask 64512
          %v416 = vsel %vm414, %v398, 0
          %418 = vmatpush.msra.mxu0 0.0
          %419 = vmatpush.msra.mxu0 0.0
          %420 = vmatpush.msra.mxu0 0.0
          %421 = vmatpush.msra.mxu0 0.0
          %422 = vmatpush.msra.mxu0 0.0
          %423 = vmatpush.msra.mxu0 0.0
          %424 = vmatpush.msra.mxu0 0.0
          %425 = vmatpush.msra.mxu0 0.0
          %426 = vmatpush.msra.mxu0 0.0
          %427 = vmatpush.msra.mxu0 0.0
          %428 = vmatpush.msra.mxu0 0.0
          %429 = vmatpush.msra.mxu0 0.0
          %430 = vmatpush.msra.mxu0 0.0
          %431 = vmatpush.msra.mxu0 0.0
          %432 = vmatpush.msra.mxu0 0.0
          %433 = vmatpush.msra.mxu0 %v207
          %434 = vmatmul.f32.gmra.mxu0 %v416
          %v435 = vpop.f32.mrf.mxu0
          %v436 = vadd.f32 0.0, %v435
          %437 = vdwg.mxu0
          %v439 = vsel %vm414, %v413, 0
          %441 = vmatpush.msra.mxu0 0.0
          %442 = vmatpush.msra.mxu0 0.0
          %443 = vmatpush.msra.mxu0 0.0
          %444 = vmatpush.msra.mxu0 0.0
          %445 = vmatpush.msra.mxu0 0.0
          %446 = vmatpush.msra.mxu0 0.0
          %447 = vmatpush.msra.mxu0 0.0
          %448 = vmatpush.msra.mxu0 0.0
          %449 = vmatpush.msra.mxu0 0.0
          %450 = vmatpush.msra.mxu0 0.0
          %451 = vmatpush.msra.mxu0 0.0
          %452 = vmatpush.msra.mxu0 0.0
          %453 = vmatpush.msra.mxu0 0.0
          %454 = vmatpush.msra.mxu0 0.0
          %455 = vmatpush.msra.mxu0 0.0
          %456 = vmatpush.msra.mxu0 %v208
          %457 = vmatmul.f32.gmra.mxu0 %v439
          %v458 = vpop.f32.mrf.mxu0
          %v459 = vadd.f32 0.0, %v458
          %460 = vdwg.mxu0
          %v461 = vld [vmem:[#allocation9] sm:$0x3]
          %v464 = vrot.slane %v459, 7
          %vm465 = vcmask 1041409
          %v466 = vsel %vm465, %v464, %v436
          %v468 = vadd.f32 %v461, %v466
          %vm469 = vcmask 254976
          %470 = vst.msk [vmem:[#allocation9] sm:$0x3] %vm469, %v468
        $region56: #{tpu_custom_call.1} parent=31 // pred_fallthru
          _
        // Predicated region
        $region57: #{tpu_custom_call.1} parent=31 // pred_check
          %p471 = pneg %p112
        $region58: #{tpu_custom_call.1} parent=31 // pred_check_branch
          %473 = sbr.rel (%p471) target = $region60
        $region59: #{tpu_custom_call.1} parent=31 // pred_region
          %475 = vsyncadd [#allocation6], 0
          %s477 = sshll.u32 [#allocation9], 4
          %s478 = int_to_ptr.vmem [resolvable:$true] %s477
          %s479 = sshll.u32 %s3, 4
          %s480 = int_to_ptr.hbm [resolvable:$true] %s479
          %482 = dma.vmem_to_hbm [thread:$0]  %s478, 32, %s480, [#allocation6]
        $region60: #{tpu_custom_call.1} parent=31 // pred_fallthru
          _
        // Predicated region
        $region61: #{tpu_custom_call.1} parent=31 // pred_check
          %p483 = pneg %p112
        $region62: #{tpu_custom_call.1} parent=31 // pred_check_branch
          %485 = sbr.rel (%p483) target = $region64
        $region63: #{tpu_custom_call.1} parent=31 // pred_region
          %487 = dma.done [#allocation6], 32
        $region64: #{tpu_custom_call.1} parent=31 // pred_fallthru
          _
      $region32: #{tpu_custom_call.1} parent=5 // pred_fallthru
        _
      %p488 = scmp.le.s32.totalorder 2, %s14
      // Predicated region
      $region65: #{tpu_custom_call.1} parent=5 // pred_check
        %p489 = pneg %p488
      $region66: #{tpu_custom_call.1} parent=5 // pred_check_branch
        %491 = sbr.rel (%p489) target = $region68
      $region67: #{tpu_custom_call.1} parent=5 // pred_region
        %s492 = ssub.s32 %s14, 2
      $region68: #{tpu_custom_call.1} parent=5 // pred_fallthru
        _
    $region6: #{tpu_custom_call.1} parent=1 // loop_footer
      %s18 = sadd.s32 1, %s14
    $region7: #{tpu_custom_call.1} parent=1 // loop_footer_branch
      %13 = sbr.rel target = $region3
    $region8: #{tpu_custom_call.1} parent=1 // loop_exit
      _
    %493 = vsyncpa [#allocation5], 1
    %s494 = scalar_lea.sflag [#allocation5], 1
    %495 = vsyncpa %s494, 1
    %496 = vsyncpa [#allocation8], 1
    %497 = vsyncpa [#allocation6], 1
    %s498 = scalar_lea.sflag [#allocation6], 1
    %499 = vsyncpa %s498, 1

</llo_original>
